<compile_context>
chip_gen: v7x
topology: tpu7x:2x2x1
jax: 0.10.0
libtpu: 0.0.40
codegen_flags: <defaults>
</compile_context>

<pallas_src>
import jax
import jax.numpy as jnp
from jax.experimental import pallas as pl
from jax.experimental.pallas import tpu as pltpu

LEAKY_SLOPE = 0.01  # torch.nn.functional.leaky_relu default negative_slope
LANE = 128


def _round_up(v, m):
    return ((v + m - 1) // m) * m


def _tile_for(n):
    """Row/col tile for the adjacency pass (N is padded to a multiple of it)."""
    if n <= 128:
        return 128
    if n < 4096:
        return 256
    return 512


def _vmem_limit_bytes():
    """~3/4 of physical VMEM (headroom for compiler scratch); safe fallback."""
    cap = None
    try:
        info = pltpu.get_tpu_info()
        for name in ("vmem_capacity_bytes", "vmem_size_bytes", "vmem_bytes"):
            cap = getattr(info, name, None)
            if cap:
                break
    except Exception:
        cap = None
    if not cap:
        cap = 64 * 1024 * 1024  # conservative physical floor (v7x)
    return int(cap) * 3 // 4


# ----------------------------------------------------------------------------
# Kernel A: per-node feature pipeline, row-tiled over N (all O(N * P) work).
#   h1 = leaky_relu(x @ W12 + b12)   -> emitted in f32 (epilogue) and bf16
#                                       (operand of the adjacency matmul).
# ----------------------------------------------------------------------------
def feature_kernel(x_ref, w12_ref, b12_ref, h1f_ref, h1b_ref):
    z = jnp.dot(x_ref[...], w12_ref[...],
                preferred_element_type=jnp.float32) + b12_ref[...]
    h1 = jnp.where(z > 0, z, LEAKY_SLOPE * z)
    h1f_ref[...] = h1
    h1b_ref[...] = h1.astype(jnp.bfloat16)


# ----------------------------------------------------------------------------
# Kernel B: the only O(N^2) work, K-tiled adjacency contraction.
#   acc += adj_tile @ h1_bf16_tile                (f32 accumulate in VMEM)
#   epilogue (last k):
#     out = tanh(h1 + relu(acc @ Wi + h1 @ Wr + b_arma))
# (leaky_relu of the ReLU'ed ARMA output is the identity, so it is folded.)
# ----------------------------------------------------------------------------
def propagate_kernel(adj_ref, h1b_ref, h1f_ref, wi_ref, wr_ref, ba_ref,
                     out_ref, acc_ref):
    @pl.when(pl.program_id(1) == 0)
    def _():
        acc_ref[...] = jnp.zeros_like(acc_ref)

    acc_ref[...] += jnp.dot(adj_ref[...], h1b_ref[...],
                            preferred_element_type=jnp.float32)

    @pl.when(pl.program_id(1) == pl.num_programs(1) - 1)
    def _():
        h1 = h1f_ref[...]
        prop = jnp.dot(acc_ref[...], wi_ref[...],
                       preferred_element_type=jnp.float32)
        root = jnp.dot(h1, wr_ref[...],
                       preferred_element_type=jnp.float32) + ba_ref[...]
        arma = jnp.maximum(prop + root, 0.0)
        out_ref[...] = jnp.tanh(h1 + arma)


# ----------------------------------------------------------------------------
# Host-side algebraic folding + lane padding of the parameters.
# ----------------------------------------------------------------------------
def fold_and_pad_params(params, out_dim):
    w1, b1, w2, b2, wi, wr, ba = params
    p = max(LANE, _round_up(out_dim, LANE))
    pad_c = p - out_dim

    # Fold Linear->Linear (no nonlinearity in between).
    w12 = w1 @ w2                                   # [cur, out]
    b12 = b1 @ w2 + b2                              # [1, out]

    pad_cols = lambda a: jnp.pad(a, ((0, 0), (0, pad_c)))
    w12p = pad_cols(w12)                            # [cur, P]
    b12p = pad_cols(b12)                            # [1, P]
    wip = jnp.pad(wi, ((0, pad_c), (0, pad_c)))     # [P, P]
    wrp = jnp.pad(wr, ((0, pad_c), (0, pad_c)))     # [P, P]
    bap = pad_cols(ba)                              # [1, P]
    return w12p, b12p, wip, wrp, bap, p


def nas_phy_forward(x, adj_f32, params, out_dim):
    """x: [N, cur] f32, adj_f32: [N, N] dense gcn-normalized adjacency."""
    n, cur = x.shape
    w12p, b12p, wip, wrp, bap, p = fold_and_pad_params(params, out_dim)

    t = _tile_for(n)
    n_pad = _round_up(n, t)
    vmem_limit = _vmem_limit_bytes()

    # Zero-pad rows (exact: padded adjacency rows/cols are zero, padded output
    # rows are sliced off).  Adjacency is cast to bf16 to halve the dominant
    # HBM stream.
    xp = jnp.pad(x, ((0, n_pad - n), (0, 0)))
    adjp = jnp.pad(adj_f32, ((0, n_pad - n), (0, n_pad - n))).astype(jnp.bfloat16)

    # Pass 1: per-node feature work, row-tiled, weights resident.
    h1f, h1b = pl.pallas_call(
        feature_kernel,
        out_shape=(jax.ShapeDtypeStruct((n_pad, p), jnp.float32),
                   jax.ShapeDtypeStruct((n_pad, p), jnp.bfloat16)),
        grid=(n_pad // t,),
        in_specs=[pl.BlockSpec((t, cur), lambda i: (i, 0)),
                  pl.BlockSpec((cur, p), lambda i: (0, 0)),
                  pl.BlockSpec((1, p), lambda i: (0, 0))],
        out_specs=(pl.BlockSpec((t, p), lambda i: (i, 0)),
                   pl.BlockSpec((t, p), lambda i: (i, 0))),
        compiler_params=pltpu.CompilerParams(
            dimension_semantics=("parallel",),
            vmem_limit_bytes=vmem_limit),
    )(xp, w12p, b12p)

    # Pass 2: stream bf16 adjacency (t, t) tiles over a (rows, K) grid with a
    # resident f32 accumulator; ARMA init/root transforms fused in the epilogue.
    out = pl.pallas_call(
        propagate_kernel,
        out_shape=jax.ShapeDtypeStruct((n_pad, p), jnp.float32),
        grid=(n_pad // t, n_pad // t),
        in_specs=[
            pl.BlockSpec((t, t), lambda i, k: (i, k)),   # adj tile (streamed)
            pl.BlockSpec((t, p), lambda i, k: (k, 0)),   # h1 bf16 K-tile
            pl.BlockSpec((t, p), lambda i, k: (i, 0)),   # h1 f32 row tile
            pl.BlockSpec((p, p), lambda i, k: (0, 0)),   # W_init (resident)
            pl.BlockSpec((p, p), lambda i, k: (0, 0)),   # W_root (resident)
            pl.BlockSpec((1, p), lambda i, k: (0, 0)),   # ARMA bias (resident)
        ],
        out_specs=pl.BlockSpec((t, p), lambda i, k: (i, 0)),
        scratch_shapes=[pltpu.VMEM((t, p), jnp.float32)],
        compiler_params=pltpu.CompilerParams(
            dimension_semantics=("parallel", "arbitrary"),
            vmem_limit_bytes=vmem_limit),
    )(adjp, h1b, h1f, wip, wrp, bap)

    # Drop padded rows and zero-padded lanes (both exactly zero-preserving).
    return out[:n, :out_dim]


# ----------------------------------------------------------------------------
# Glue: dense gcn-normalized adjacency from (edge_index, edge_weight), exactly
# as torch_geometric.nn.conv.gcn_conv.gcn_norm(add_self_loops=False).
# ----------------------------------------------------------------------------
def build_normalized_adjacency(edge_index, edge_weight, num_nodes):
    row, col = edge_index[0], edge_index[1]                   # src, dst
    deg = jnp.zeros((num_nodes,), jnp.float32).at[col].add(edge_weight)
    deg_inv_sqrt = jnp.where(deg > 0, jax.lax.rsqrt(deg), 0.0)
    norm = deg_inv_sqrt[row] * edge_weight * deg_inv_sqrt[col]
    # A_hat[i, j] accumulates norm for every edge j -> i (target-row convention)
    adj = jnp.zeros((num_nodes, num_nodes), jnp.float32).at[col, row].add(norm)
    return adj


def init_params(key, cur_dim, hidden_dim, output_dim):
    ks = jax.random.split(key, 7)
    s = 0.1
    # weights stored pre-transposed so the math is x @ W (+ b)
    w1 = s * jax.random.normal(ks[0], (cur_dim, hidden_dim), jnp.float32)
    b1 = s * jax.random.normal(ks[1], (1, hidden_dim), jnp.float32)
    w2 = s * jax.random.normal(ks[2], (hidden_dim, output_dim), jnp.float32)
    b2 = s * jax.random.normal(ks[3], (1, output_dim), jnp.float32)
    wi = s * jax.random.normal(ks[4], (output_dim, output_dim), jnp.float32)  # ARMA init_weight
    wr = s * jax.random.normal(ks[5], (output_dim, output_dim), jnp.float32)  # ARMA root_weight
    ba = s * jax.random.normal(ks[6], (1, output_dim), jnp.float32)           # ARMA bias
    return (w1, b1, w2, b2, wi, wr, ba)


def reference_forward(x, adj_f32, params):
    """Pure-JAX f32 reference mirroring the PyTorch module."""
    w1, b1, w2, b2, wi, wr, ba = params
    lrelu = lambda v: jnp.where(v > 0, v, LEAKY_SLOPE * v)
    h = x @ w1 + b1
    h1 = lrelu(h @ w2 + b2)
    arma = jnp.maximum(adj_f32 @ (h1 @ wi) + h1 @ wr + ba, 0.0)
    return jnp.tanh(h1 + lrelu(arma))


def _run_case(key, num_nodes, cur_dim, hidden_dim, output_dim, num_edges):
    k_x, k_src, k_dst, k_w, k_p = jax.random.split(key, 5)
    x = jax.random.normal(k_x, (num_nodes, cur_dim), jnp.float32)
    src = jax.random.randint(k_src, (num_edges,), 0, num_nodes)
    dst = jax.random.randint(k_dst, (num_edges,), 0, num_nodes)
    edge_index = jnp.stack([src, dst], axis=0)                # [2, E]
    edge_weight = jax.random.uniform(k_w, (num_edges,), jnp.float32,
                                     minval=0.1, maxval=1.0)  # [E]

    params = init_params(k_p, cur_dim, hidden_dim, output_dim)
    adj_f32 = build_normalized_adjacency(edge_index, edge_weight, num_nodes)

    out = nas_phy_forward(x, adj_f32, params, output_dim)
    out = jax.block_until_ready(out)

    ref = reference_forward(x, adj_f32, params)
    assert out.shape == (num_nodes, output_dim)
    # bf16 adjacency / bf16 h1 propagation operands -> loose tolerance vs the
    # all-f32 PyTorch-mirror reference.
    max_err = float(jnp.max(jnp.abs(out - ref)))
    assert jnp.allclose(out, ref, atol=2e-2, rtol=2e-2), max_err


if __name__ == "__main__":
    key = jax.random.PRNGKey(0)
    k1, k2 = jax.random.split(key)

    # Small case (single-tile grids).
    _run_case(k1, num_nodes=16, cur_dim=8, hidden_dim=32, output_dim=16,
              num_edges=48)
    # Case that exercises row padding, multi-row-tile grid and K accumulation.
    _run_case(k2, num_nodes=300, cur_dim=12, hidden_dim=24, output_dim=20,
              num_edges=2000)

    print("KERNEL_OK")
</pallas_src>

<mosaic_0001>
module attributes {stable_mosaic.version = 11 : i64} {
  func.func @feature_kernel(%arg0: i32, %arg1: memref<128x8xf32, #tpu.memory_space<vmem>>, %arg2: memref<8x128xf32, #tpu.memory_space<vmem>>, %arg3: memref<1x128xf32, #tpu.memory_space<vmem>>, %arg4: memref<128x128xf32, #tpu.memory_space<vmem>>, %arg5: memref<128x128xbf16, #tpu.memory_space<vmem>>) attributes {dimension_semantics = [#tpu.dimension_semantics<parallel>], iteration_bounds = array<i64: 1>, scalar_prefetch = 0 : i64, scratch_operands = 0 : i64, tpu.core_type = #tpu.core_type<tc>, window_params = [{transform_indices = @transform_0, window_bounds = array<i64: 128, 8>}, {pipeline_mode = #tpu.pipeline_mode<synchronous>, transform_indices = @transform_1, window_bounds = array<i64: 8, 128>}, {pipeline_mode = #tpu.pipeline_mode<synchronous>, transform_indices = @transform_2, window_bounds = array<i64: 1, 128>}, {transform_indices = @transform_3, window_bounds = array<i64: 128, 128>}, {transform_indices = @transform_4, window_bounds = array<i64: 128, 128>}]} {
    %c0 = arith.constant 0 : index
    %c0_0 = arith.constant 0 : index
    %0 = vector.load %arg1[%c0, %c0_0] : memref<128x8xf32, #tpu.memory_space<vmem>>, vector<128x8xf32>
    %c0_1 = arith.constant 0 : index
    %c0_2 = arith.constant 0 : index
    %1 = vector.load %arg2[%c0_1, %c0_2] : memref<8x128xf32, #tpu.memory_space<vmem>>, vector<8x128xf32>
    %cst = arith.constant dense<0.000000e+00> : vector<128x128xf32>
    %2 = tpu.matmul %0, %1, %cst {dimension_numbers = #tpu.dot_dimension_numbers<[1], [0], [0], [1], [0, 0, 1, 1], [], []>} : vector<128x8xf32>, vector<8x128xf32>, vector<128x128xf32> -> vector<128x128xf32>
    %c0_3 = arith.constant 0 : index
    %c0_4 = arith.constant 0 : index
    %3 = vector.load %arg3[%c0_3, %c0_4] : memref<1x128xf32, #tpu.memory_space<vmem>>, vector<1x128xf32>
    %4 = vector.broadcast %3 : vector<1x128xf32> to vector<128x128xf32>
    %5 = arith.addf %2, %4 : vector<128x128xf32>
    %cst_5 = arith.constant 0.000000e+00 : f32
    %6 = vector.broadcast %cst_5 : f32 to vector<128x128xf32>
    %7 = arith.cmpf ogt, %5, %6 : vector<128x128xf32>
    %cst_6 = arith.constant 0.00999999977 : f32
    %8 = vector.broadcast %cst_6 : f32 to vector<128x128xf32>
    %9 = arith.mulf %8, %5 : vector<128x128xf32>
    %10 = arith.select %7, %5, %9 : vector<128x128xi1>, vector<128x128xf32>
    %c0_7 = arith.constant 0 : index
    %c0_8 = arith.constant 0 : index
    %11 = vector.load %arg4[%c0_7, %c0_8] : memref<128x128xf32, #tpu.memory_space<vmem>>, vector<128x128xf32>
    tpu.vector_store %arg4[%c0_7, %c0_8], %10 {strides = array<i32>} : memref<128x128xf32, #tpu.memory_space<vmem>>, vector<128x128xf32>,
    %12 = arith.truncf %10 : vector<128x128xf32> to vector<128x128xbf16>
    %c0_9 = arith.constant 0 : index
    %c0_10 = arith.constant 0 : index
    %13 = vector.load %arg5[%c0_9, %c0_10] : memref<128x128xbf16, #tpu.memory_space<vmem>>, vector<128x128xbf16>
    tpu.vector_store %arg5[%c0_9, %c0_10], %12 {strides = array<i32>} : memref<128x128xbf16, #tpu.memory_space<vmem>>, vector<128x128xbf16>,
    return
  }
  func.func @transform_0(%arg0: i32) -> (i32, i32) {
    %c0_i32 = arith.constant 0 : i32
    %c0_i32_0 = arith.constant 0 : i32
    return %arg0, %c0_i32 : i32, i32
  }
  func.func @transform_1(%arg0: i32) -> (i32, i32) {
    %c0_i32 = arith.constant 0 : i32
    %c0_i32_0 = arith.constant 0 : i32
    %c0_i32_1 = arith.constant 0 : i32
    return %c0_i32, %c0_i32_0 : i32, i32
  }
  func.func @transform_2(%arg0: i32) -> (i32, i32) {
    %c0_i32 = arith.constant 0 : i32
    %c0_i32_0 = arith.constant 0 : i32
    %c0_i32_1 = arith.constant 0 : i32
    return %c0_i32, %c0_i32_0 : i32, i32
  }
  func.func @transform_3(%arg0: i32) -> (i32, i32) {
    %c0_i32 = arith.constant 0 : i32
    %c0_i32_0 = arith.constant 0 : i32
    return %arg0, %c0_i32 : i32, i32
  }
  func.func @transform_4(%arg0: i32) -> (i32, i32) {
    %c0_i32 = arith.constant 0 : i32
    %c0_i32_0 = arith.constant 0 : i32
    return %arg0, %c0_i32 : i32, i32
  }
}

</mosaic_0001>

<llo_original>
// kernel: tpu_custom_call.1
$region0: #{tpu_custom_call.1}
  #allocation0 [shape = 'u32[]', space=smem, size = 0x4, offset = 0x4, fixed_abs, tag = 'smem constant byte address 0x4 - core index']
  #allocation1 [shape = 'u32[144,128]{1,0:T(1,128)}', space=vmem, size = 0x12000, scoped, tag = 'internal scratch']
  %s0 = inlined_call_operand.vmem [shape: f32[128,8], index: 0, kind: input, shape index: {}]
  %s1 = inlined_call_operand.vmem [shape: f32[8,128], index: 1, kind: input, shape index: {}]
  %s2 = inlined_call_operand.vmem [shape: f32[1,128], index: 2, kind: input, shape index: {}]
  %s3 = inlined_call_operand.hbm [shape: f32[128,128], index: 3, kind: output, shape index: {0}]
  %s4 = inlined_call_operand.hbm [shape: bf16[128,128], index: 4, kind: output, shape index: {1}]
  %5 = xla_tuple %s3, %s4
  %s6 = sld [smem:[#allocation0]]
  $region30: #{tpu_custom_call.1} parent=0
    _
  %s8 = ssub.s32 1, %s6
  %s9 = scalar_select 0, %s8, %s6
  $region1: #{tpu_custom_call.1} parent=0
    #allocation2 [shape = 'u8[65536]{0}', space=vmem, size = 0x10000, scoped, tag = 'output window, operand 0, single buffered']
    #allocation3 [shape = 's32[1]{0}', space=sflag, size = 0x4, scoped, tag = 'scoped memory for tpu_custom_call.1']
    #allocation4 [shape = 'u8[32768]{0}', space=vmem, size = 0x8000, scoped, tag = 'output window, operand 1, single buffered']
    #allocation5 [shape = 's32[1]{0}', space=sflag, size = 0x4, scoped, tag = 'scoped memory for tpu_custom_call.1']
    %10 = vsyncpa [#allocation3], 0
    %11 = vsyncpa [#allocation5], 0
    // Predicated region
    $region2: #{tpu_custom_call.1} parent=1 // pred_check
      _
    $region3: #{tpu_custom_call.1} parent=1 // pred_check_branch
      %13 = sbr.rel (0) target = $region5
    $region4: #{tpu_custom_call.1} parent=1 // pred_region
      _
    $region5: #{tpu_custom_call.1} parent=1 // pred_fallthru
      _
    // Predicated region
    $region6: #{tpu_custom_call.1} parent=1 // pred_check
      _
    $region7: #{tpu_custom_call.1} parent=1 // pred_check_branch
      %15 = sbr.rel (0) target = $region9
    $region8: #{tpu_custom_call.1} parent=1 // pred_region
      _
    $region9: #{tpu_custom_call.1} parent=1 // pred_fallthru
      _
    // Predicated region
    $region10: #{tpu_custom_call.1} parent=1 // pred_check
      _
    $region11: #{tpu_custom_call.1} parent=1 // pred_check_branch
      %17 = sbr.rel (0) target = $region13
    $region12: #{tpu_custom_call.1} parent=1 // pred_region
      _
    $region13: #{tpu_custom_call.1} parent=1 // pred_fallthru
      _
    %v18 = vld [vmem:[%s0] sm:$0xff]
    %v19 = vld [vmem:[%s0 + $0x8] sm:$0xff]
    %v20 = vld [vmem:[%s0 + $0x10] sm:$0xff]
    %v21 = vld [vmem:[%s0 + $0x18] sm:$0xff]
    %v22 = vld [vmem:[%s0 + $0x20] sm:$0xff]
    %v23 = vld [vmem:[%s0 + $0x28] sm:$0xff]
    %v24 = vld [vmem:[%s0 + $0x30] sm:$0xff]
    %v25 = vld [vmem:[%s0 + $0x38] sm:$0xff]
    %v26 = vld [vmem:[%s0 + $0x40] sm:$0xff]
    %v27 = vld [vmem:[%s0 + $0x48] sm:$0xff]
    %v28 = vld [vmem:[%s0 + $0x50] sm:$0xff]
    %v29 = vld [vmem:[%s0 + $0x58] sm:$0xff]
    %v30 = vld [vmem:[%s0 + $0x60] sm:$0xff]
    %v31 = vld [vmem:[%s0 + $0x68] sm:$0xff]
    %v32 = vld [vmem:[%s0 + $0x70] sm:$0xff]
    %v33 = vld [vmem:[%s0 + $0x78] sm:$0xff]
    %v34 = vld [vmem:[%s1] sm:$0xff]
    %v35 = vld [vmem:[%s2] sm:$0x1]
    %v37 = vlaneseq
    %v38 = vshrl.u32 %v37, 7
    %v39 = vsub.s32 0, %v38
    %v40 = vrot.slane %v35, %v39
    %vm42 = vcmask 64512
    %v44 = vsel %vm42, %v18, 0
    %v47 = vsel %vm42, %v19, 0
    %v50 = vsel %vm42, %v20, 0
    %v53 = vsel %vm42, %v21, 0
    %v56 = vsel %vm42, %v22, 0
    %v59 = vsel %vm42, %v23, 0
    %v62 = vsel %vm42, %v24, 0
    %v65 = vsel %vm42, %v25, 0
    %v68 = vsel %vm42, %v26, 0
    %v71 = vsel %vm42, %v27, 0
    %v74 = vsel %vm42, %v28, 0
    %v77 = vsel %vm42, %v29, 0
    %v80 = vsel %vm42, %v30, 0
    %v83 = vsel %vm42, %v31, 0
    %v86 = vsel %vm42, %v32, 0
    %v89 = vsel %vm42, %v33, 0
    %91 = vmatprep.subr.mxu0 0.0
    %92 = vmatpush1.msra.mxu0 %v34
    %93 = vmatprep.subr.mxu0 0.0
    %94 = vmatpush1.msra.mxu0 0.0
    %95 = vmatprep.subr.mxu0 0.0
    %96 = vmatpush1.msra.mxu0 0.0
    %97 = vmatprep.subr.mxu0 0.0
    %98 = vmatpush1.msra.mxu0 0.0
    %99 = vmatprep.subr.mxu0 0.0
    %100 = vmatpush1.msra.mxu0 0.0
    %101 = vmatprep.subr.mxu0 0.0
    %102 = vmatpush1.msra.mxu0 0.0
    %103 = vmatprep.subr.mxu0 0.0
    %104 = vmatpush1.msra.mxu0 0.0
    %105 = vmatprep.subr.mxu0 0.0
    %106 = vmatpush1.msra.mxu0 0.0
    %107 = vmatprep.subr.mxu0 0.0
    %108 = vmatpush1.msra.mxu0 0.0
    %109 = vmatprep.subr.mxu0 0.0
    %110 = vmatpush1.msra.mxu0 0.0
    %111 = vmatprep.subr.mxu0 0.0
    %112 = vmatpush1.msra.mxu0 0.0
    %113 = vmatprep.subr.mxu0 0.0
    %114 = vmatpush1.msra.mxu0 0.0
    %115 = vmatprep.subr.mxu0 0.0
    %116 = vmatpush1.msra.mxu0 0.0
    %117 = vmatprep.subr.mxu0 0.0
    %118 = vmatpush1.msra.mxu0 0.0
    %119 = vmatprep.subr.mxu0 0.0
    %120 = vmatpush1.msra.mxu0 0.0
    %121 = vmatprep.subr.mxu0 0.0
    %122 = vmatpush1.msra.mxu0 0.0
    %123 = vmatprep.subr.mxu0 0.0
    %124 = vmatpush1.msra.mxu0 0.0
    %125 = vmatprep.subr.mxu0 0.0
    %126 = vmatpush1.msra.mxu0 0.0
    %127 = vmatprep.subr.mxu0 0.0
    %128 = vmatpush1.msra.mxu0 0.0
    %129 = vmatprep.subr.mxu0 0.0
    %130 = vmatpush1.msra.mxu0 0.0
    %131 = vmatprep.subr.mxu0 0.0
    %132 = vmatpush1.msra.mxu0 0.0
    %133 = vmatprep.subr.mxu0 0.0
    %134 = vmatpush1.msra.mxu0 0.0
    %135 = vmatprep.subr.mxu0 0.0
    %136 = vmatpush1.msra.mxu0 0.0
    %137 = vmatprep.subr.mxu0 0.0
    %138 = vmatpush1.msra.mxu0 0.0
    %139 = vmatprep.subr.mxu0 0.0
    %140 = vmatpush1.msra.mxu0 0.0
    %141 = vmatprep.subr.mxu0 0.0
    %142 = vmatpush1.msra.mxu0 0.0
    %143 = vmatprep.subr.mxu0 0.0
    %144 = vmatpush1.msra.mxu0 0.0
    %145 = vmatprep.subr.mxu0 0.0
    %146 = vmatpush1.msra.mxu0 0.0
    %147 = vmatprep.subr.mxu0 0.0
    %148 = vmatpush1.msra.mxu0 0.0
    %149 = vmatprep.subr.mxu0 0.0
    %150 = vmatpush1.msra.mxu0 0.0
    %151 = vmatprep.subr.mxu0 0.0
    %152 = vmatpush1.msra.mxu0 0.0
    %153 = vmatprep.subr.mxu0 0.0
    %154 = vmatpush1.msra.mxu0 0.0
    %155 = vmatprep.mubr.f32.mxu0 0.0
    %156 = vmatmul.mubr.f32.gmra.mrb[0].mxu0 %v44
    %v157 = vpop.f32.mrb[0].mxu0
    %v158 = vadd.f32 %v40, %v157
    %v159 = vpop.f32.mrb[0].mxu0
    %160 = vmatprep.mubr.f32.mxu0 0.0
    %161 = vmatmul.mubr.f32.gmra.mrb[0].mxu0 %v47
    %v162 = vpop.f32.mrb[0].mxu0
    %v163 = vadd.f32 %v40, %v162
    %v164 = vpop.f32.mrb[0].mxu0
    %165 = vmatprep.mubr.f32.mxu0 0.0
    %166 = vmatmul.mubr.f32.gmra.mrb[0].mxu0 %v50
    %v167 = vpop.f32.mrb[0].mxu0
    %v168 = vadd.f32 %v40, %v167
    %v169 = vpop.f32.mrb[0].mxu0
    %170 = vmatprep.mubr.f32.mxu0 0.0
    %171 = vmatmul.mubr.f32.gmra.mrb[0].mxu0 %v53
    %v172 = vpop.f32.mrb[0].mxu0
    %v173 = vadd.f32 %v40, %v172
    %v174 = vpop.f32.mrb[0].mxu0
    %175 = vmatprep.mubr.f32.mxu0 0.0
    %176 = vmatmul.mubr.f32.gmra.mrb[0].mxu0 %v56
    %v177 = vpop.f32.mrb[0].mxu0
    %v178 = vadd.f32 %v40, %v177
    %v179 = vpop.f32.mrb[0].mxu0
    %180 = vmatprep.mubr.f32.mxu0 0.0
    %181 = vmatmul.mubr.f32.gmra.mrb[0].mxu0 %v59
    %v182 = vpop.f32.mrb[0].mxu0
    %v183 = vadd.f32 %v40, %v182
    %v184 = vpop.f32.mrb[0].mxu0
    %185 = vmatprep.mubr.f32.mxu0 0.0
    %186 = vmatmul.mubr.f32.gmra.mrb[0].mxu0 %v62
    %v187 = vpop.f32.mrb[0].mxu0
    %v188 = vadd.f32 %v40, %v187
    %v189 = vpop.f32.mrb[0].mxu0
    %190 = vmatprep.mubr.f32.mxu0 0.0
    %191 = vmatmul.mubr.f32.gmra.mrb[0].mxu0 %v65
    %v192 = vpop.f32.mrb[0].mxu0
    %v193 = vadd.f32 %v40, %v192
    %v194 = vpop.f32.mrb[0].mxu0
    %195 = vmatprep.mubr.f32.mxu0 0.0
    %196 = vmatmul.mubr.f32.gmra.mrb[0].mxu0 %v68
    %v197 = vpop.f32.mrb[0].mxu0
    %v198 = vadd.f32 %v40, %v197
    %v199 = vpop.f32.mrb[0].mxu0
    %200 = vmatprep.mubr.f32.mxu0 0.0
    %201 = vmatmul.mubr.f32.gmra.mrb[0].mxu0 %v71
    %v202 = vpop.f32.mrb[0].mxu0
    %v203 = vadd.f32 %v40, %v202
    %v204 = vpop.f32.mrb[0].mxu0
    %205 = vmatprep.mubr.f32.mxu0 0.0
    %206 = vmatmul.mubr.f32.gmra.mrb[0].mxu0 %v74
    %v207 = vpop.f32.mrb[0].mxu0
    %v208 = vadd.f32 %v40, %v207
    %v209 = vpop.f32.mrb[0].mxu0
    %210 = vmatprep.mubr.f32.mxu0 0.0
    %211 = vmatmul.mubr.f32.gmra.mrb[0].mxu0 %v77
    %v212 = vpop.f32.mrb[0].mxu0
    %v213 = vadd.f32 %v40, %v212
    %v214 = vpop.f32.mrb[0].mxu0
    %215 = vmatprep.mubr.f32.mxu0 0.0
    %216 = vmatmul.mubr.f32.gmra.mrb[0].mxu0 %v80
    %v217 = vpop.f32.mrb[0].mxu0
    %v218 = vadd.f32 %v40, %v217
    %v219 = vpop.f32.mrb[0].mxu0
    %220 = vmatprep.mubr.f32.mxu0 0.0
    %221 = vmatmul.mubr.f32.gmra.mrb[0].mxu0 %v83
    %v222 = vpop.f32.mrb[0].mxu0
    %v223 = vadd.f32 %v40, %v222
    %v224 = vpop.f32.mrb[0].mxu0
    %225 = vmatprep.mubr.f32.mxu0 0.0
    %226 = vmatmul.mubr.f32.gmra.mrb[0].mxu0 %v86
    %v227 = vpop.f32.mrb[0].mxu0
    %v228 = vadd.f32 %v40, %v227
    %v229 = vpop.f32.mrb[0].mxu0
    %230 = vmatprep.mubr.f32.mxu0 0.0
    %231 = vmatmul.mubr.f32.gmra.mrb[0].mxu0 %v89
    %v232 = vpop.f32.mrb[0].mxu0
    %v233 = vadd.f32 %v40, %v232
    %v234 = vpop.f32.mrb[0].mxu0
    %235 = vdwg.mxu0
    %vm236 = vcmp.gt.f32.partialorder %v158, 0.0
    %vm237 = vcmp.gt.f32.partialorder %v163, 0.0
    %vm238 = vcmp.gt.f32.partialorder %v168, 0.0
    %vm239 = vcmp.gt.f32.partialorder %v173, 0.0
    %vm240 = vcmp.gt.f32.partialorder %v178, 0.0
    %vm241 = vcmp.gt.f32.partialorder %v183, 0.0
    %vm242 = vcmp.gt.f32.partialorder %v188, 0.0
    %vm243 = vcmp.gt.f32.partialorder %v193, 0.0
    %vm244 = vcmp.gt.f32.partialorder %v198, 0.0
    %vm245 = vcmp.gt.f32.partialorder %v203, 0.0
    %vm246 = vcmp.gt.f32.partialorder %v208, 0.0
    %vm247 = vcmp.gt.f32.partialorder %v213, 0.0
    %vm248 = vcmp.gt.f32.partialorder %v218, 0.0
    %vm249 = vcmp.gt.f32.partialorder %v223, 0.0
    %vm250 = vcmp.gt.f32.partialorder %v228, 0.0
    %vm251 = vcmp.gt.f32.partialorder %v233, 0.0
    %v252 = vmul.f32 %v158, 0.01
    %v253 = vmul.f32 %v163, 0.01
    %v254 = vmul.f32 %v168, 0.01
    %v255 = vmul.f32 %v173, 0.01
    %v256 = vmul.f32 %v178, 0.01
    %v257 = vmul.f32 %v183, 0.01
    %v258 = vmul.f32 %v188, 0.01
    %v259 = vmul.f32 %v193, 0.01
    %v260 = vmul.f32 %v198, 0.01
    %v261 = vmul.f32 %v203, 0.01
    %v262 = vmul.f32 %v208, 0.01
    %v263 = vmul.f32 %v213, 0.01
    %v264 = vmul.f32 %v218, 0.01
    %v265 = vmul.f32 %v223, 0.01
    %v266 = vmul.f32 %v228, 0.01
    %v267 = vmul.f32 %v233, 0.01
    %v268 = vsel %vm236, %v158, %v252
    %v269 = vsel %vm237, %v163, %v253
    %v270 = vsel %vm238, %v168, %v254
    %v271 = vsel %vm239, %v173, %v255
    %v272 = vsel %vm240, %v178, %v256
    %v273 = vsel %vm241, %v183, %v257
    %v274 = vsel %vm242, %v188, %v258
    %v275 = vsel %vm243, %v193, %v259
    %v276 = vsel %vm244, %v198, %v260
    %v277 = vsel %vm245, %v203, %v261
    %v278 = vsel %vm246, %v208, %v262
    %v279 = vsel %vm247, %v213, %v263
    %v280 = vsel %vm248, %v218, %v264
    %v281 = vsel %vm249, %v223, %v265
    %v282 = vsel %vm250, %v228, %v266
    %v283 = vsel %vm251, %v233, %v267
    %284 = vst [vmem:[#allocation2] sm:$0xff] %v268
    %285 = vst [vmem:[#allocation2 + $0x8] sm:$0xff] %v269
    %286 = vst [vmem:[#allocation2 + $0x10] sm:$0xff] %v270
    %287 = vst [vmem:[#allocation2 + $0x18] sm:$0xff] %v271
    %288 = vst [vmem:[#allocation2 + $0x20] sm:$0xff] %v272
    %289 = vst [vmem:[#allocation2 + $0x28] sm:$0xff] %v273
    %290 = vst [vmem:[#allocation2 + $0x30] sm:$0xff] %v274
    %291 = vst [vmem:[#allocation2 + $0x38] sm:$0xff] %v275
    %292 = vst [vmem:[#allocation2 + $0x40] sm:$0xff] %v276
    %293 = vst [vmem:[#allocation2 + $0x48] sm:$0xff] %v277
    %294 = vst [vmem:[#allocation2 + $0x50] sm:$0xff] %v278
    %295 = vst [vmem:[#allocation2 + $0x58] sm:$0xff] %v279
    %296 = vst [vmem:[#allocation2 + $0x60] sm:$0xff] %v280
    %297 = vst [vmem:[#allocation2 + $0x68] sm:$0xff] %v281
    %298 = vst [vmem:[#allocation2 + $0x70] sm:$0xff] %v282
    %299 = vst [vmem:[#allocation2 + $0x78] sm:$0xff] %v283
    %v300 = vpack.c.bf16 %v269, %v268
    %v301 = vpack.c.bf16 %v271, %v270
    %v302 = vpack.c.bf16 %v273, %v272
    %v303 = vpack.c.bf16 %v275, %v274
    %v304 = vpack.c.bf16 %v277, %v276
    %v305 = vpack.c.bf16 %v279, %v278
    %v306 = vpack.c.bf16 %v281, %v280
    %v307 = vpack.c.bf16 %v283, %v282
    %v316 = vunpack.c.l.b16 %v300
    %v317 = vunpack.c.h.b16 %v300
    %v318 = vunpack.c.l.b16 %v301
    %v319 = vunpack.c.h.b16 %v301
    %v320 = vunpack.c.l.b16 %v302
    %v321 = vunpack.c.h.b16 %v302
    %v322 = vunpack.c.l.b16 %v303
    %v323 = vunpack.c.h.b16 %v303
    %v324 = vunpack.c.l.b16 %v304
    %v325 = vunpack.c.h.b16 %v304
    %v326 = vunpack.c.l.b16 %v305
    %v327 = vunpack.c.h.b16 %v305
    %v328 = vunpack.c.l.b16 %v306
    %v329 = vunpack.c.h.b16 %v306
    %v330 = vunpack.c.l.b16 %v307
    %v331 = vunpack.c.h.b16 %v307
    %v332 = vpack.c.b16 %v316, %v316
    %v333 = vpack.c.b16 %v317, %v317
    %v334 = vpack.c.b16 %v318, %v318
    %v335 = vpack.c.b16 %v319, %v319
    %v336 = vpack.c.b16 %v320, %v320
    %v337 = vpack.c.b16 %v321, %v321
    %v338 = vpack.c.b16 %v322, %v322
    %v339 = vpack.c.b16 %v323, %v323
    %v340 = vpack.c.b16 %v324, %v324
    %v341 = vpack.c.b16 %v325, %v325
    %v342 = vpack.c.b16 %v326, %v326
    %v343 = vpack.c.b16 %v327, %v327
    %v344 = vpack.c.b16 %v328, %v328
    %v345 = vpack.c.b16 %v329, %v329
    %v346 = vpack.c.b16 %v330, %v330
    %v347 = vpack.c.b16 %v331, %v331
    %364 = vst [vmem:[#allocation4] sm:$0xf] %v332
    %365 = vst [vmem:[#allocation4 + $0x4] sm:$0xf] %v333
    %366 = vst [vmem:[#allocation4 + $0x8] sm:$0xf] %v334
    %367 = vst [vmem:[#allocation4 + $0xc] sm:$0xf] %v335
    %368 = vst [vmem:[#allocation4 + $0x10] sm:$0xf] %v336
    %369 = vst [vmem:[#allocation4 + $0x14] sm:$0xf] %v337
    %370 = vst [vmem:[#allocation4 + $0x18] sm:$0xf] %v338
    %371 = vst [vmem:[#allocation4 + $0x1c] sm:$0xf] %v339
    %372 = vst [vmem:[#allocation4 + $0x20] sm:$0xf] %v340
    %373 = vst [vmem:[#allocation4 + $0x24] sm:$0xf] %v341
    %374 = vst [vmem:[#allocation4 + $0x28] sm:$0xf] %v342
    %375 = vst [vmem:[#allocation4 + $0x2c] sm:$0xf] %v343
    %376 = vst [vmem:[#allocation4 + $0x30] sm:$0xf] %v344
    %377 = vst [vmem:[#allocation4 + $0x34] sm:$0xf] %v345
    %378 = vst [vmem:[#allocation4 + $0x38] sm:$0xf] %v346
    %379 = vst [vmem:[#allocation4 + $0x3c] sm:$0xf] %v347
    // Predicated region
    $region14: #{tpu_custom_call.1} parent=1 // pred_check
      _
    $region15: #{tpu_custom_call.1} parent=1 // pred_check_branch
      %381 = sbr.rel (0) target = $region17
    $region16: #{tpu_custom_call.1} parent=1 // pred_region
      %s383 = ssub.s32 2048, 2048
      %384 = vsyncadd [#allocation3], %s383
      %s385 = sshll.u32 [#allocation2], 4
      %s386 = int_to_ptr.vmem [resolvable:$true] %s385
      %391 = dma.vmem_to_hbm [thread:$0]  %s386, 2048, %s3, [#allocation3], 128, 128, 8
    $region17: #{tpu_custom_call.1} parent=1 // pred_fallthru
      _
    // Predicated region
    $region18: #{tpu_custom_call.1} parent=1 // pred_check
      _
    $region19: #{tpu_custom_call.1} parent=1 // pred_check_branch
      %393 = sbr.rel (0) target = $region21
    $region20: #{tpu_custom_call.1} parent=1 // pred_region
      %s395 = ssub.s32 1024, 1024
      %396 = vsyncadd [#allocation5], %s395
      %s397 = sshll.u32 [#allocation4], 4
      %s398 = int_to_ptr.vmem [resolvable:$true] %s397
      %403 = dma.vmem_to_hbm [thread:$0]  %s398, 1024, %s4, [#allocation5], 64, 64, 4
    $region21: #{tpu_custom_call.1} parent=1 // pred_fallthru
      _
    // Predicated region
    $region22: #{tpu_custom_call.1} parent=1 // pred_check
      _
    $region23: #{tpu_custom_call.1} parent=1 // pred_check_branch
      %405 = sbr.rel (0) target = $region25
    $region24: #{tpu_custom_call.1} parent=1 // pred_region
      %406 = dma.done [#allocation3], 2048
    $region25: #{tpu_custom_call.1} parent=1 // pred_fallthru
      _
    // Predicated region
    $region26: #{tpu_custom_call.1} parent=1 // pred_check
      _
    $region27: #{tpu_custom_call.1} parent=1 // pred_check_branch
      %408 = sbr.rel (0) target = $region29
    $region28: #{tpu_custom_call.1} parent=1 // pred_region
      %409 = dma.done [#allocation5], 1024
    $region29: #{tpu_custom_call.1} parent=1 // pred_fallthru
      _
    %410 = vsyncpa [#allocation3], 1
    %411 = vsyncpa [#allocation5], 1

</llo_original>
